<compile_context>
chip_gen: v6e
topology: v6e:2x2x1
jax: 0.10.0
libtpu: 0.0.40
codegen_flags: <defaults>
</compile_context>

<pallas_src>
import jax
import jax.numpy as jnp
from jax.experimental import pallas as pl
from jax.experimental.pallas import tpu as pltpu

INPUT_DIM, HIDDEN_DIM, OUTPUT_DIM = 768, 150, 5
HIDDEN_PAD, OUT_PAD = 256, 128          # lane-aligned padded dims
LEAKY_SLOPE = 0.01                      # torch.nn.LeakyReLU default
MAX_TILE_B = 2048                       # amortizes per-step overhead, ~20 MiB VMEM
MEGACORE_SPLIT_B = 256                  # force >=2 grid steps beyond this (v7x 2 TCs)


def _cdiv(a, b):
    return (a + b - 1) // b


def _round_up(x, m):
    return _cdiv(x, m) * m


# ---------------------------------------------------------------------------
# Pallas kernel: one batch tile of the fused classifier head.
# ---------------------------------------------------------------------------
def classifier_kernel(x_ref, w1_ref, b1_ref, w23_ref, b23_ref, o_ref):
    # f32 activations DMA'd straight from HBM; cast to bf16 in-VMEM for the MXU.
    x = x_ref[...].astype(jnp.bfloat16)                           # [Tb, 768]

    # Linear(768 -> 256 padded): bf16 MXU, f32 accumulation.
    h1 = jnp.dot(x, w1_ref[...], preferred_element_type=jnp.float32)
    h1 = h1 + b1_ref[...]                                         # f32 [Tb, 256]
    # LeakyReLU (Dropout(0.2) identity at inference); max(x, a*x) == leaky_relu
    # for 0 < a < 1 and avoids the compare+select.
    h1 = jnp.maximum(h1, LEAKY_SLOPE * h1)

    # Fused Linear(150->150) @ Linear(150->5), padded to (256 -> 128), kept in
    # f32 (tiny GEMM, completely hidden under the activation DMA).
    # (Dropout(0.3) between them is identity at inference.)
    logits = jnp.dot(h1, w23_ref[...], preferred_element_type=jnp.float32)
    o_ref[...] = (logits + b23_ref[...]).astype(o_ref.dtype)      # bf16 [Tb, 128]


# ---------------------------------------------------------------------------
# Wrapper: balanced batch grid, resident weights, lane-dense bf16 output.
# ---------------------------------------------------------------------------
def classifier_head(hs, prepared):
    """hs: [B, 768] float32 CLS hidden states -> logits [B, 5] float32."""
    w1p, b1p, w23p, b23p = prepared
    B = hs.shape[0]

    # Balanced tiles: never round a small remainder up to a whole MAX_TILE_B
    # tile; guarantee >=2 grid steps for large B so both v7x TCs get work.
    n_tiles = _cdiv(B, MAX_TILE_B)
    if B > MEGACORE_SPLIT_B:
        n_tiles = max(n_tiles, 2)
    tile_b = _round_up(_cdiv(B, n_tiles), 16)
    Bp = n_tiles * tile_b

    x = hs if Bp == B else jnp.pad(hs, ((0, Bp - B), (0, 0)))     # <16 rows pad

    out = pl.pallas_call(
        classifier_kernel,
        out_shape=jax.ShapeDtypeStruct((Bp, OUT_PAD), jnp.bfloat16),
        grid=(n_tiles,),
        in_specs=[
            pl.BlockSpec((tile_b, INPUT_DIM), lambda i: (i, 0)),       # x tile (f32)
            pl.BlockSpec((INPUT_DIM, HIDDEN_PAD), lambda i: (0, 0)),   # w1 (resident, bf16)
            pl.BlockSpec((1, HIDDEN_PAD), lambda i: (0, 0)),           # b1 (f32)
            pl.BlockSpec((HIDDEN_PAD, OUT_PAD), lambda i: (0, 0)),     # w23 (resident, f32)
            pl.BlockSpec((1, OUT_PAD), lambda i: (0, 0)),              # b23 (f32)
        ],
        out_specs=pl.BlockSpec((tile_b, OUT_PAD), lambda i: (i, 0)),
        compiler_params=pltpu.CompilerParams(
            dimension_semantics=("parallel",),
            vmem_limit_bytes=40 * 1024 * 1024,
        ),
    )(x, w1p, b1p, w23p, b23p)

    return out[:B, :OUTPUT_DIM].astype(jnp.float32)


# ---------------------------------------------------------------------------
# Parameter construction / preparation.
# ---------------------------------------------------------------------------
def init_params(key):
    """Raw classifier-head parameters with the module's shapes.

    Linear weights stored as [in_features, out_features] (transposed vs.
    torch.nn.Linear.weight), biases as [1, out_features].
    """
    ks = jax.random.split(key, 6)
    s1 = 1.0 / jnp.sqrt(INPUT_DIM)
    s2 = 1.0 / jnp.sqrt(HIDDEN_DIM)
    w1 = jax.random.uniform(ks[0], (INPUT_DIM, HIDDEN_DIM), jnp.float32, -s1, s1)
    b1 = jax.random.uniform(ks[1], (1, HIDDEN_DIM), jnp.float32, -s1, s1)
    w2 = jax.random.uniform(ks[2], (HIDDEN_DIM, HIDDEN_DIM), jnp.float32, -s2, s2)
    b2 = jax.random.uniform(ks[3], (1, HIDDEN_DIM), jnp.float32, -s2, s2)
    w3 = jax.random.uniform(ks[4], (HIDDEN_DIM, OUTPUT_DIM), jnp.float32, -s2, s2)
    b3 = jax.random.uniform(ks[5], (1, OUTPUT_DIM), jnp.float32, -s2, s2)
    return (w1, b1, w2, b2, w3, b3)


def prepare_params(params):
    """Fuse Linear2/Linear3, pad to lane-aligned shapes.

    Only w1 is cast to bf16 (for the first MXU matmul); the fused w23 and all
    biases stay f32 so the second layer is not double-rounded.
    """
    w1, b1, w2, b2, w3, b3 = params
    # Algebraic fusion (exact in math; dropout identity, no activation between).
    w23 = w2 @ w3                      # [150, 5]
    b23 = b2 @ w3 + b3                 # [1, 5]

    w1p = (jnp.zeros((INPUT_DIM, HIDDEN_PAD), jnp.float32)
           .at[:, :HIDDEN_DIM].set(w1).astype(jnp.bfloat16))
    b1p = jnp.zeros((1, HIDDEN_PAD), jnp.float32).at[:, :HIDDEN_DIM].set(b1)
    w23p = (jnp.zeros((HIDDEN_PAD, OUT_PAD), jnp.float32)
            .at[:HIDDEN_DIM, :OUTPUT_DIM].set(w23))
    b23p = jnp.zeros((1, OUT_PAD), jnp.float32).at[:, :OUTPUT_DIM].set(b23)

    # Zero-padded hidden lanes stay exactly zero through bias/LeakyReLU, and the
    # corresponding (zero) rows of w23p contribute nothing -> semantics preserved.
    return (w1p, b1p, w23p, b23p)


# ---------------------------------------------------------------------------
# Synthetic BERT stand-in + full forward.
# ---------------------------------------------------------------------------
def synthetic_bert_last_hidden_state(key, input_ids, attention_mask):
    """Deterministic stand-in for BertModel(...)[0]: [B, S, 768]."""
    vocab = 100
    emb = jax.random.normal(key, (vocab, INPUT_DIM), jnp.float32) * 0.02
    hidden = emb[input_ids]                                       # [B, S, 768]
    hidden = hidden * attention_mask[..., None].astype(jnp.float32)
    return hidden


def classifier_for_bert_forward(input_ids, attention_mask, prepared, bert_key):
    last_hidden = synthetic_bert_last_hidden_state(bert_key, input_ids,
                                                   attention_mask)
    hs = last_hidden[:, 0, :]                                     # CLS token [B, 768]
    return classifier_head(hs, prepared)


# ---------------------------------------------------------------------------
if __name__ == "__main__":
    key = jax.random.PRNGKey(0)
    k_param, k_bert, k_ids = jax.random.split(key, 3)

    B, S = 8, 8
    input_ids = jax.random.randint(k_ids, (B, S), 0, 100, dtype=jnp.int32)
    attention_mask = jnp.ones((B, S), dtype=jnp.int32)

    params = init_params(k_param)
    prepared = prepare_params(params)

    logits = classifier_for_bert_forward(input_ids, attention_mask, prepared,
                                         k_bert)
    logits = jax.block_until_ready(logits)

    assert logits.shape == (B, OUTPUT_DIM), logits.shape
    assert logits.dtype == jnp.float32, logits.dtype

    hs = synthetic_bert_last_hidden_state(k_bert, input_ids,
                                          attention_mask)[:, 0, :]

    # 1) Reference matching the kernel's math (bf16 first GEMM, f32 second
    #    GEMM, bf16 output round).
    w1p, b1p, w23p, b23p = prepared
    h1m = jnp.dot(hs.astype(jnp.bfloat16), w1p,
                  preferred_element_type=jnp.float32) + b1p
    h1m = jnp.maximum(h1m, LEAKY_SLOPE * h1m)
    ref_matched = (jnp.dot(h1m, w23p, preferred_element_type=jnp.float32)
                   + b23p).astype(jnp.bfloat16)[:, :OUTPUT_DIM].astype(jnp.float32)
    assert jnp.allclose(logits, ref_matched, atol=2e-3, rtol=1e-2), (
        jnp.max(jnp.abs(logits - ref_matched)))

    # 2) Loose check against the original unfused f32 module math.
    w1, b1, w2, b2, w3, b3 = params
    h1f = hs @ w1 + b1
    h1f = jnp.where(h1f > 0, h1f, LEAKY_SLOPE * h1f)
    ref_exact = (h1f @ w2 + b2) @ w3 + b3
    assert jnp.allclose(logits, ref_exact, atol=3e-2, rtol=3e-2), (
        jnp.max(jnp.abs(logits - ref_exact)))

    print("KERNEL_OK")
</pallas_src>

<mosaic_0001>
module attributes {stable_mosaic.version = 11 : i64} {
  func.func @classifier_kernel(%arg0: i32, %arg1: memref<16x768xf32, #tpu.memory_space<vmem>>, %arg2: memref<768x256xbf16, #tpu.memory_space<vmem>>, %arg3: memref<1x256xf32, #tpu.memory_space<vmem>>, %arg4: memref<256x128xf32, #tpu.memory_space<vmem>>, %arg5: memref<1x128xf32, #tpu.memory_space<vmem>>, %arg6: memref<16x128xbf16, #tpu.memory_space<vmem>>) attributes {dimension_semantics = [#tpu.dimension_semantics<parallel>], iteration_bounds = array<i64: 1>, scalar_prefetch = 0 : i64, scratch_operands = 0 : i64, tpu.core_type = #tpu.core_type<tc>, window_params = [{transform_indices = @transform_0, window_bounds = array<i64: 16, 768>}, {pipeline_mode = #tpu.pipeline_mode<synchronous>, transform_indices = @transform_1, window_bounds = array<i64: 768, 256>}, {pipeline_mode = #tpu.pipeline_mode<synchronous>, transform_indices = @transform_2, window_bounds = array<i64: 1, 256>}, {pipeline_mode = #tpu.pipeline_mode<synchronous>, transform_indices = @transform_3, window_bounds = array<i64: 256, 128>}, {pipeline_mode = #tpu.pipeline_mode<synchronous>, transform_indices = @transform_4, window_bounds = array<i64: 1, 128>}, {transform_indices = @transform_5, window_bounds = array<i64: 16, 128>}]} {
    %c0 = arith.constant 0 : index
    %c0_0 = arith.constant 0 : index
    %0 = vector.load %arg1[%c0, %c0_0] : memref<16x768xf32, #tpu.memory_space<vmem>>, vector<16x768xf32>
    %1 = arith.truncf %0 : vector<16x768xf32> to vector<16x768xbf16>
    %c0_1 = arith.constant 0 : index
    %c0_2 = arith.constant 0 : index
    %2 = vector.load %arg2[%c0_1, %c0_2] : memref<768x256xbf16, #tpu.memory_space<vmem>>, vector<768x256xbf16>
    %cst = arith.constant dense<0.000000e+00> : vector<16x256xf32>
    %3 = tpu.matmul %1, %2, %cst {dimension_numbers = #tpu.dot_dimension_numbers<[1], [0], [0], [1], [0, 0, 1, 1], [], []>} : vector<16x768xbf16>, vector<768x256xbf16>, vector<16x256xf32> -> vector<16x256xf32>
    %c0_3 = arith.constant 0 : index
    %c0_4 = arith.constant 0 : index
    %4 = vector.load %arg3[%c0_3, %c0_4] : memref<1x256xf32, #tpu.memory_space<vmem>>, vector<1x256xf32>
    %5 = vector.broadcast %4 : vector<1x256xf32> to vector<16x256xf32>
    %6 = arith.addf %3, %5 : vector<16x256xf32>
    %cst_5 = arith.constant 0.00999999977 : f32
    %7 = vector.broadcast %cst_5 : f32 to vector<16x256xf32>
    %8 = arith.mulf %7, %6 : vector<16x256xf32>
    %9 = arith.maximumf %6, %8 : vector<16x256xf32>
    %c0_6 = arith.constant 0 : index
    %c0_7 = arith.constant 0 : index
    %10 = vector.load %arg4[%c0_6, %c0_7] : memref<256x128xf32, #tpu.memory_space<vmem>>, vector<256x128xf32>
    %cst_8 = arith.constant dense<0.000000e+00> : vector<16x128xf32>
    %11 = tpu.matmul %9, %10, %cst_8 {dimension_numbers = #tpu.dot_dimension_numbers<[1], [0], [0], [1], [0, 0, 1, 1], [], []>} : vector<16x256xf32>, vector<256x128xf32>, vector<16x128xf32> -> vector<16x128xf32>
    %c0_9 = arith.constant 0 : index
    %c0_10 = arith.constant 0 : index
    %12 = vector.load %arg5[%c0_9, %c0_10] : memref<1x128xf32, #tpu.memory_space<vmem>>, vector<1x128xf32>
    %13 = vector.broadcast %12 : vector<1x128xf32> to vector<16x128xf32>
    %14 = arith.addf %11, %13 : vector<16x128xf32>
    %15 = arith.truncf %14 : vector<16x128xf32> to vector<16x128xbf16>
    %c0_11 = arith.constant 0 : index
    %c0_12 = arith.constant 0 : index
    %16 = vector.load %arg6[%c0_11, %c0_12] : memref<16x128xbf16, #tpu.memory_space<vmem>>, vector<16x128xbf16>
    tpu.vector_store %arg6[%c0_11, %c0_12], %15 {strides = array<i32>} : memref<16x128xbf16, #tpu.memory_space<vmem>>, vector<16x128xbf16>,
    return
  }
  func.func @transform_0(%arg0: i32) -> (i32, i32) {
    %c0_i32 = arith.constant 0 : i32
    %c0_i32_0 = arith.constant 0 : i32
    return %arg0, %c0_i32 : i32, i32
  }
  func.func @transform_1(%arg0: i32) -> (i32, i32) {
    %c0_i32 = arith.constant 0 : i32
    %c0_i32_0 = arith.constant 0 : i32
    %c0_i32_1 = arith.constant 0 : i32
    return %c0_i32, %c0_i32_0 : i32, i32
  }
  func.func @transform_2(%arg0: i32) -> (i32, i32) {
    %c0_i32 = arith.constant 0 : i32
    %c0_i32_0 = arith.constant 0 : i32
    %c0_i32_1 = arith.constant 0 : i32
    return %c0_i32, %c0_i32_0 : i32, i32
  }
  func.func @transform_3(%arg0: i32) -> (i32, i32) {
    %c0_i32 = arith.constant 0 : i32
    %c0_i32_0 = arith.constant 0 : i32
    %c0_i32_1 = arith.constant 0 : i32
    return %c0_i32, %c0_i32_0 : i32, i32
  }
  func.func @transform_4(%arg0: i32) -> (i32, i32) {
    %c0_i32 = arith.constant 0 : i32
    %c0_i32_0 = arith.constant 0 : i32
    %c0_i32_1 = arith.constant 0 : i32
    return %c0_i32, %c0_i32_0 : i32, i32
  }
  func.func @transform_5(%arg0: i32) -> (i32, i32) {
    %c0_i32 = arith.constant 0 : i32
    %c0_i32_0 = arith.constant 0 : i32
    return %arg0, %c0_i32 : i32, i32
  }
}

</mosaic_0001>

<llo_original>
// kernel: tpu_custom_call.1
$region0: #{tpu_custom_call.1}
  #allocation0 [shape = 'u32[]', space=smem, size = 0x4, offset = 0x4, fixed_abs, tag = 'smem constant byte address 0x4 - core index']
  #allocation1 [shape = 'u32[144,128]{1,0:T(1,128)}', space=vmem, size = 0x12000, scoped, tag = 'internal scratch']
  %s0 = inlined_call_operand.hbm [shape: f32[16,768], index: 0, kind: input, shape index: {}]
  %s1 = inlined_call_operand.hbm [shape: bf16[768,256], index: 1, kind: input, shape index: {}]
  %s2 = inlined_call_operand.vmem [shape: f32[1,256], index: 2, kind: input, shape index: {}]
  %s3 = inlined_call_operand.hbm [shape: f32[256,128], index: 3, kind: input, shape index: {}]
  %s4 = inlined_call_operand.vmem [shape: f32[1,128], index: 4, kind: input, shape index: {}]
  %s5 = inlined_call_operand.hbm [shape: bf16[16,128], index: 5, kind: output, shape index: {}]
  %s6 = sld [smem:[#allocation0]]
  $region42: #{tpu_custom_call.1} parent=0
    _
  %s8 = ssub.s32 1, %s6
  %s9 = scalar_select 0, %s8, %s6
  $region1: #{tpu_custom_call.1} parent=0
    #allocation2 [shape = 'u8[49152]{0}', space=vmem, size = 0xc000, scoped, tag = 'input window, operand 0, single buffered']
    #allocation3 [shape = 's32[1]{0}', space=sflag, size = 0x4, scoped, tag = 'scoped memory for tpu_custom_call.1']
    #allocation4 [shape = 's32[1]{0}', space=sflag, size = 0x4, scoped, tag = 'scoped memory for tpu_custom_call.1']
    #allocation5 [shape = 'u8[393216]{0}', space=vmem, size = 0x60000, scoped, tag = 'input window, operand 1, single buffered']
    #allocation6 [shape = 's32[1]{0}', space=sflag, size = 0x4, scoped, tag = 'scoped memory for tpu_custom_call.1']
    #allocation7 [shape = 'u8[131072]{0}', space=vmem, size = 0x20000, scoped, tag = 'input window, operand 3, single buffered']
    #allocation8 [shape = 'u8[4096]{0}', space=vmem, size = 0x1000, scoped, tag = 'output window, operand 0, single buffered']
    %10 = vsyncpa [#allocation3], 0
    %11 = vsyncpa [#allocation6], 0
    %12 = vsyncpa [#allocation4], 0
    // Predicated region
    $region2: #{tpu_custom_call.1} parent=1 // pred_check
      _
    $region3: #{tpu_custom_call.1} parent=1 // pred_check_branch
      %14 = sbr.rel (0) target = $region5
    $region4: #{tpu_custom_call.1} parent=1 // pred_region
      %s16 = ssub.s32 1536, 1536
      %17 = vsyncadd [#allocation3], %s16
      %s18 = sshll.u32 [#allocation2], 4
      %s19 = int_to_ptr.vmem [resolvable:$true] %s18
      %24 = dma.hbm_to_vmem [thread:$0]  %s0, 1536, %s19, [#allocation3], 768, 768, 48
    $region5: #{tpu_custom_call.1} parent=1 // pred_fallthru
      _
    // Predicated region
    $region6: #{tpu_custom_call.1} parent=1 // pred_check
      _
    $region7: #{tpu_custom_call.1} parent=1 // pred_check_branch
      %26 = sbr.rel (0) target = $region9
    $region8: #{tpu_custom_call.1} parent=1 // pred_region
      %s28 = ssub.s32 12288, 12288
      %29 = vsyncadd [#allocation6], %s28
      %s30 = sshll.u32 [#allocation5], 4
      %s31 = int_to_ptr.vmem [resolvable:$true] %s30
      %36 = dma.hbm_to_vmem [thread:$0]  %s1, 12288, %s31, [#allocation6], 128, 128, 8
    $region9: #{tpu_custom_call.1} parent=1 // pred_fallthru
      _
    // Predicated region
    $region10: #{tpu_custom_call.1} parent=1 // pred_check
      _
    $region11: #{tpu_custom_call.1} parent=1 // pred_check_branch
      %38 = sbr.rel (0) target = $region13
    $region12: #{tpu_custom_call.1} parent=1 // pred_region
      _
    $region13: #{tpu_custom_call.1} parent=1 // pred_fallthru
      _
    // Predicated region
    $region14: #{tpu_custom_call.1} parent=1 // pred_check
      _
    $region15: #{tpu_custom_call.1} parent=1 // pred_check_branch
      %40 = sbr.rel (0) target = $region17
    $region16: #{tpu_custom_call.1} parent=1 // pred_region
      %s42 = ssub.s32 4096, 4096
      %43 = vsyncadd [#allocation6], %s42
      %s44 = sshll.u32 [#allocation7], 4
      %s45 = int_to_ptr.vmem [resolvable:$true] %s44
      %50 = dma.hbm_to_vmem [thread:$0]  %s3, 4096, %s45, [#allocation6], 128, 128, 8
    $region17: #{tpu_custom_call.1} parent=1 // pred_fallthru
      _
    // Predicated region
    $region18: #{tpu_custom_call.1} parent=1 // pred_check
      _
    $region19: #{tpu_custom_call.1} parent=1 // pred_check_branch
      %52 = sbr.rel (0) target = $region21
    $region20: #{tpu_custom_call.1} parent=1 // pred_region
      _
    $region21: #{tpu_custom_call.1} parent=1 // pred_fallthru
      _
    // Predicated region
    $region22: #{tpu_custom_call.1} parent=1 // pred_check
      _
    $region23: #{tpu_custom_call.1} parent=1 // pred_check_branch
      %54 = sbr.rel (0) target = $region25
    $region24: #{tpu_custom_call.1} parent=1 // pred_region
      %55 = dma.done [#allocation3], 1536
    $region25: #{tpu_custom_call.1} parent=1 // pred_fallthru
      _
    // Predicated region
    $region26: #{tpu_custom_call.1} parent=1 // pred_check
      _
    $region27: #{tpu_custom_call.1} parent=1 // pred_check_branch
      %57 = sbr.rel (0) target = $region29
    $region28: #{tpu_custom_call.1} parent=1 // pred_region
      %58 = dma.done [#allocation6], 12288
    $region29: #{tpu_custom_call.1} parent=1 // pred_fallthru
      _
    // Predicated region
    $region30: #{tpu_custom_call.1} parent=1 // pred_check
      _
    $region31: #{tpu_custom_call.1} parent=1 // pred_check_branch
      %60 = sbr.rel (0) target = $region33
    $region32: #{tpu_custom_call.1} parent=1 // pred_region
      %61 = dma.done [#allocation6], 4096
    $region33: #{tpu_custom_call.1} parent=1 // pred_fallthru
      _
    %v62 = vld [vmem:[#allocation2] sm:$0xff]
    %v63 = vld [vmem:[#allocation2 + $0x8] sm:$0xff]
    %v64 = vld [vmem:[#allocation2 + $0x10] sm:$0xff]
    %v65 = vld [vmem:[#allocation2 + $0x18] sm:$0xff]
    %v66 = vld [vmem:[#allocation2 + $0x20] sm:$0xff]
    %v67 = vld [vmem:[#allocation2 + $0x28] sm:$0xff]
    %v68 = vld [vmem:[#allocation2 + $0x30] sm:$0xff]
    %v69 = vld [vmem:[#allocation2 + $0x38] sm:$0xff]
    %v70 = vld [vmem:[#allocation2 + $0x40] sm:$0xff]
    %v71 = vld [vmem:[#allocation2 + $0x48] sm:$0xff]
    %v72 = vld [vmem:[#allocation2 + $0x50] sm:$0xff]
    %v73 = vld [vmem:[#allocation2 + $0x58] sm:$0xff]
    %v74 = vpack.c.bf16 %v68, %v62
    %v75 = vpack.c.bf16 %v69, %v63
    %v76 = vpack.c.bf16 %v70, %v64
    %v77 = vpack.c.bf16 %v71, %v65
    %v78 = vpack.c.bf16 %v72, %v66
    %v79 = vpack.c.bf16 %v73, %v67
    %v80 = vld [vmem:[#allocation5] sm:$0xff]
    %v81 = vld [vmem:[#allocation5 + $0x8] sm:$0xff]
    %v82 = vld [vmem:[#allocation5 + $0x10] sm:$0xff]
    %v83 = vld [vmem:[#allocation5 + $0x18] sm:$0xff]
    %v84 = vld [vmem:[#allocation5 + $0x20] sm:$0xff]
    %v85 = vld [vmem:[#allocation5 + $0x28] sm:$0xff]
    %v86 = vld [vmem:[#allocation5 + $0x30] sm:$0xff]
    %v87 = vld [vmem:[#allocation5 + $0x38] sm:$0xff]
    %v88 = vld [vmem:[#allocation5 + $0x40] sm:$0xff]
    %v89 = vld [vmem:[#allocation5 + $0x48] sm:$0xff]
    %v90 = vld [vmem:[#allocation5 + $0x50] sm:$0xff]
    %v91 = vld [vmem:[#allocation5 + $0x58] sm:$0xff]
    %v92 = vld [vmem:[#allocation5 + $0x60] sm:$0xff]
    %v93 = vld [vmem:[#allocation5 + $0x68] sm:$0xff]
    %v94 = vld [vmem:[#allocation5 + $0x70] sm:$0xff]
    %v95 = vld [vmem:[#allocation5 + $0x78] sm:$0xff]
    %v96 = vld [vmem:[#allocation5 + $0x80] sm:$0xff]
    %v97 = vld [vmem:[#allocation5 + $0x88] sm:$0xff]
    %v98 = vld [vmem:[#allocation5 + $0x90] sm:$0xff]
    %v99 = vld [vmem:[#allocation5 + $0x98] sm:$0xff]
    %v100 = vld [vmem:[#allocation5 + $0xa0] sm:$0xff]
    %v101 = vld [vmem:[#allocation5 + $0xa8] sm:$0xff]
    %v102 = vld [vmem:[#allocation5 + $0xb0] sm:$0xff]
    %v103 = vld [vmem:[#allocation5 + $0xb8] sm:$0xff]
    %v104 = vld [vmem:[#allocation5 + $0xc0] sm:$0xff]
    %v105 = vld [vmem:[#allocation5 + $0xc8] sm:$0xff]
    %v106 = vld [vmem:[#allocation5 + $0xd0] sm:$0xff]
    %v107 = vld [vmem:[#allocation5 + $0xd8] sm:$0xff]
    %v108 = vld [vmem:[#allocation5 + $0xe0] sm:$0xff]
    %v109 = vld [vmem:[#allocation5 + $0xe8] sm:$0xff]
    %v110 = vld [vmem:[#allocation5 + $0xf0] sm:$0xff]
    %v111 = vld [vmem:[#allocation5 + $0xf8] sm:$0xff]
    %v112 = vld [vmem:[#allocation5 + $0x100] sm:$0xff]
    %v113 = vld [vmem:[#allocation5 + $0x108] sm:$0xff]
    %v114 = vld [vmem:[#allocation5 + $0x110] sm:$0xff]
    %v115 = vld [vmem:[#allocation5 + $0x118] sm:$0xff]
    %v116 = vld [vmem:[#allocation5 + $0x120] sm:$0xff]
    %v117 = vld [vmem:[#allocation5 + $0x128] sm:$0xff]
    %v118 = vld [vmem:[#allocation5 + $0x130] sm:$0xff]
    %v119 = vld [vmem:[#allocation5 + $0x138] sm:$0xff]
    %v120 = vld [vmem:[#allocation5 + $0x140] sm:$0xff]
    %v121 = vld [vmem:[#allocation5 + $0x148] sm:$0xff]
    %v122 = vld [vmem:[#allocation5 + $0x150] sm:$0xff]
    %v123 = vld [vmem:[#allocation5 + $0x158] sm:$0xff]
    %v124 = vld [vmem:[#allocation5 + $0x160] sm:$0xff]
    %v125 = vld [vmem:[#allocation5 + $0x168] sm:$0xff]
    %v126 = vld [vmem:[#allocation5 + $0x170] sm:$0xff]
    %v127 = vld [vmem:[#allocation5 + $0x178] sm:$0xff]
    %v128 = vld [vmem:[#allocation5 + $0x180] sm:$0xff]
    %v129 = vld [vmem:[#allocation5 + $0x188] sm:$0xff]
    %v130 = vld [vmem:[#allocation5 + $0x190] sm:$0xff]
    %v131 = vld [vmem:[#allocation5 + $0x198] sm:$0xff]
    %v132 = vld [vmem:[#allocation5 + $0x1a0] sm:$0xff]
    %v133 = vld [vmem:[#allocation5 + $0x1a8] sm:$0xff]
    %v134 = vld [vmem:[#allocation5 + $0x1b0] sm:$0xff]
    %v135 = vld [vmem:[#allocation5 + $0x1b8] sm:$0xff]
    %v136 = vld [vmem:[#allocation5 + $0x1c0] sm:$0xff]
    %v137 = vld [vmem:[#allocation5 + $0x1c8] sm:$0xff]
    %v138 = vld [vmem:[#allocation5 + $0x1d0] sm:$0xff]
    %v139 = vld [vmem:[#allocation5 + $0x1d8] sm:$0xff]
    %v140 = vld [vmem:[#allocation5 + $0x1e0] sm:$0xff]
    %v141 = vld [vmem:[#allocation5 + $0x1e8] sm:$0xff]
    %v142 = vld [vmem:[#allocation5 + $0x1f0] sm:$0xff]
    %v143 = vld [vmem:[#allocation5 + $0x1f8] sm:$0xff]
    %v144 = vld [vmem:[#allocation5 + $0x200] sm:$0xff]
    %v145 = vld [vmem:[#allocation5 + $0x208] sm:$0xff]
    %v146 = vld [vmem:[#allocation5 + $0x210] sm:$0xff]
    %v147 = vld [vmem:[#allocation5 + $0x218] sm:$0xff]
    %v148 = vld [vmem:[#allocation5 + $0x220] sm:$0xff]
    %v149 = vld [vmem:[#allocation5 + $0x228] sm:$0xff]
    %v150 = vld [vmem:[#allocation5 + $0x230] sm:$0xff]
    %v151 = vld [vmem:[#allocation5 + $0x238] sm:$0xff]
    %v152 = vld [vmem:[#allocation5 + $0x240] sm:$0xff]
    %v153 = vld [vmem:[#allocation5 + $0x248] sm:$0xff]
    %v154 = vld [vmem:[#allocation5 + $0x250] sm:$0xff]
    %v155 = vld [vmem:[#allocation5 + $0x258] sm:$0xff]
    %v156 = vld [vmem:[#allocation5 + $0x260] sm:$0xff]
    %v157 = vld [vmem:[#allocation5 + $0x268] sm:$0xff]
    %v158 = vld [vmem:[#allocation5 + $0x270] sm:$0xff]
    %v159 = vld [vmem:[#allocation5 + $0x278] sm:$0xff]
    %v160 = vld [vmem:[#allocation5 + $0x280] sm:$0xff]
    %v161 = vld [vmem:[#allocation5 + $0x288] sm:$0xff]
    %v162 = vld [vmem:[#allocation5 + $0x290] sm:$0xff]
    %v163 = vld [vmem:[#allocation5 + $0x298] sm:$0xff]
    %v164 = vld [vmem:[#allocation5 + $0x2a0] sm:$0xff]
    %v165 = vld [vmem:[#allocation5 + $0x2a8] sm:$0xff]
    %v166 = vld [vmem:[#allocation5 + $0x2b0] sm:$0xff]
    %v167 = vld [vmem:[#allocation5 + $0x2b8] sm:$0xff]
    %v168 = vld [vmem:[#allocation5 + $0x2c0] sm:$0xff]
    %v169 = vld [vmem:[#allocation5 + $0x2c8] sm:$0xff]
    %v170 = vld [vmem:[#allocation5 + $0x2d0] sm:$0xff]
    %v171 = vld [vmem:[#allocation5 + $0x2d8] sm:$0xff]
    %v172 = vld [vmem:[#allocation5 + $0x2e0] sm:$0xff]
    %v173 = vld [vmem:[#allocation5 + $0x2e8] sm:$0xff]
    %v174 = vld [vmem:[#allocation5 + $0x2f0] sm:$0xff]
    %v175 = vld [vmem:[#allocation5 + $0x2f8] sm:$0xff]
    %v176 = vld [vmem:[%s2] sm:$0x3]
    %v178 = vlaneseq
    %v179 = vshrl.u32 %v178, 7
    %v180 = vsub.s32 0, %v179
    %v181 = vrot.slane %v176, %v180
    %v182 = vlaneseq
    %v183 = vshrl.u32 %v182, 7
    %v184 = vsub.s32 1, %v183
    %v185 = vrot.slane %v176, %v184
    %v284 = vunpack.c.l.b16 %v80
    %v285 = vunpack.c.h.b16 %v80
    %v286 = vunpack.c.l.b16 %v81
    %v287 = vunpack.c.h.b16 %v81
    %v288 = vunpack.c.l.b16 %v82
    %v289 = vunpack.c.h.b16 %v82
    %v290 = vunpack.c.l.b16 %v83
    %v291 = vunpack.c.h.b16 %v83
    %v292 = vunpack.c.l.b16 %v84
    %v293 = vunpack.c.h.b16 %v84
    %v294 = vunpack.c.l.b16 %v85
    %v295 = vunpack.c.h.b16 %v85
    %v296 = vunpack.c.l.b16 %v86
    %v297 = vunpack.c.h.b16 %v86
    %v298 = vunpack.c.l.b16 %v87
    %v299 = vunpack.c.h.b16 %v87
    %v300 = vunpack.c.l.b16 %v88
    %v301 = vunpack.c.h.b16 %v88
    %v302 = vunpack.c.l.b16 %v89
    %v303 = vunpack.c.h.b16 %v89
    %v304 = vunpack.c.l.b16 %v90
    %v305 = vunpack.c.h.b16 %v90
    %v306 = vunpack.c.l.b16 %v91
    %v307 = vunpack.c.h.b16 %v91
    %v308 = vunpack.c.l.b16 %v92
    %v309 = vunpack.c.h.b16 %v92
    %v310 = vunpack.c.l.b16 %v93
    %v311 = vunpack.c.h.b16 %v93
    %v312 = vunpack.c.l.b16 %v94
    %v313 = vunpack.c.h.b16 %v94
    %v314 = vunpack.c.l.b16 %v95
    %v315 = vunpack.c.h.b16 %v95
    %v316 = vunpack.c.l.b16 %v96
    %v317 = vunpack.c.h.b16 %v96
    %v318 = vunpack.c.l.b16 %v97
    %v319 = vunpack.c.h.b16 %v97
    %v320 = vunpack.c.l.b16 %v98
    %v321 = vunpack.c.h.b16 %v98
    %v322 = vunpack.c.l.b16 %v99
    %v323 = vunpack.c.h.b16 %v99
    %v324 = vunpack.c.l.b16 %v100
    %v325 = vunpack.c.h.b16 %v100
    %v326 = vunpack.c.l.b16 %v101
    %v327 = vunpack.c.h.b16 %v101
    %v328 = vunpack.c.l.b16 %v102
    %v329 = vunpack.c.h.b16 %v102
    %v330 = vunpack.c.l.b16 %v103
    %v331 = vunpack.c.h.b16 %v103
    %v332 = vunpack.c.l.b16 %v104
    %v333 = vunpack.c.h.b16 %v104
    %v334 = vunpack.c.l.b16 %v105
    %v335 = vunpack.c.h.b16 %v105
    %v336 = vunpack.c.l.b16 %v106
    %v337 = vunpack.c.h.b16 %v106
    %v338 = vunpack.c.l.b16 %v107
    %v339 = vunpack.c.h.b16 %v107
    %v340 = vunpack.c.l.b16 %v108
    %v341 = vunpack.c.h.b16 %v108
    %v342 = vunpack.c.l.b16 %v109
    %v343 = vunpack.c.h.b16 %v109
    %v344 = vunpack.c.l.b16 %v110
    %v345 = vunpack.c.h.b16 %v110
    %v346 = vunpack.c.l.b16 %v111
    %v347 = vunpack.c.h.b16 %v111
    %v348 = vunpack.c.l.b16 %v112
    %v349 = vunpack.c.h.b16 %v112
    %v350 = vunpack.c.l.b16 %v113
    %v351 = vunpack.c.h.b16 %v113
    %v352 = vunpack.c.l.b16 %v114
    %v353 = vunpack.c.h.b16 %v114
    %v354 = vunpack.c.l.b16 %v115
    %v355 = vunpack.c.h.b16 %v115
    %v356 = vunpack.c.l.b16 %v116
    %v357 = vunpack.c.h.b16 %v116
    %v358 = vunpack.c.l.b16 %v117
    %v359 = vunpack.c.h.b16 %v117
    %v360 = vunpack.c.l.b16 %v118
    %v361 = vunpack.c.h.b16 %v118
    %v362 = vunpack.c.l.b16 %v119
    %v363 = vunpack.c.h.b16 %v119
    %v364 = vunpack.c.l.b16 %v120
    %v365 = vunpack.c.h.b16 %v120
    %v366 = vunpack.c.l.b16 %v121
    %v367 = vunpack.c.h.b16 %v121
    %v368 = vunpack.c.l.b16 %v122
    %v369 = vunpack.c.h.b16 %v122
    %v370 = vunpack.c.l.b16 %v123
    %v371 = vunpack.c.h.b16 %v123
    %v372 = vunpack.c.l.b16 %v124
    %v373 = vunpack.c.h.b16 %v124
    %v374 = vunpack.c.l.b16 %v125
    %v375 = vunpack.c.h.b16 %v125
    %v376 = vunpack.c.l.b16 %v126
    %v377 = vunpack.c.h.b16 %v126
    %v378 = vunpack.c.l.b16 %v127
    %v379 = vunpack.c.h.b16 %v127
    %v380 = vunpack.c.l.b16 %v128
    %v381 = vunpack.c.h.b16 %v128
    %v382 = vunpack.c.l.b16 %v129
    %v383 = vunpack.c.h.b16 %v129
    %v384 = vunpack.c.l.b16 %v130
    %v385 = vunpack.c.h.b16 %v130
    %v386 = vunpack.c.l.b16 %v131
    %v387 = vunpack.c.h.b16 %v131
    %v388 = vunpack.c.l.b16 %v132
    %v389 = vunpack.c.h.b16 %v132
    %v390 = vunpack.c.l.b16 %v133
    %v391 = vunpack.c.h.b16 %v133
    %v392 = vunpack.c.l.b16 %v134
    %v393 = vunpack.c.h.b16 %v134
    %v394 = vunpack.c.l.b16 %v135
    %v395 = vunpack.c.h.b16 %v135
    %v396 = vunpack.c.l.b16 %v136
    %v397 = vunpack.c.h.b16 %v136
    %v398 = vunpack.c.l.b16 %v137
    %v399 = vunpack.c.h.b16 %v137
    %v400 = vunpack.c.l.b16 %v138
    %v401 = vunpack.c.h.b16 %v138
    %v402 = vunpack.c.l.b16 %v139
    %v403 = vunpack.c.h.b16 %v139
    %v404 = vunpack.c.l.b16 %v140
    %v405 = vunpack.c.h.b16 %v140
    %v406 = vunpack.c.l.b16 %v141
    %v407 = vunpack.c.h.b16 %v141
    %v408 = vunpack.c.l.b16 %v142
    %v409 = vunpack.c.h.b16 %v142
    %v410 = vunpack.c.l.b16 %v143
    %v411 = vunpack.c.h.b16 %v143
    %v412 = vunpack.c.l.b16 %v144
    %v413 = vunpack.c.h.b16 %v144
    %v414 = vunpack.c.l.b16 %v145
    %v415 = vunpack.c.h.b16 %v145
    %v416 = vunpack.c.l.b16 %v146
    %v417 = vunpack.c.h.b16 %v146
    %v418 = vunpack.c.l.b16 %v147
    %v419 = vunpack.c.h.b16 %v147
    %v420 = vunpack.c.l.b16 %v148
    %v421 = vunpack.c.h.b16 %v148
    %v422 = vunpack.c.l.b16 %v149
    %v423 = vunpack.c.h.b16 %v149
    %v424 = vunpack.c.l.b16 %v150
    %v425 = vunpack.c.h.b16 %v150
    %v426 = vunpack.c.l.b16 %v151
    %v427 = vunpack.c.h.b16 %v151
    %v428 = vunpack.c.l.b16 %v152
    %v429 = vunpack.c.h.b16 %v152
    %v430 = vunpack.c.l.b16 %v153
    %v431 = vunpack.c.h.b16 %v153
    %v432 = vunpack.c.l.b16 %v154
    %v433 = vunpack.c.h.b16 %v154
    %v434 = vunpack.c.l.b16 %v155
    %v435 = vunpack.c.h.b16 %v155
    %v436 = vunpack.c.l.b16 %v156
    %v437 = vunpack.c.h.b16 %v156
    %v438 = vunpack.c.l.b16 %v157
    %v439 = vunpack.c.h.b16 %v157
    %v440 = vunpack.c.l.b16 %v158
    %v441 = vunpack.c.h.b16 %v158
    %v442 = vunpack.c.l.b16 %v159
    %v443 = vunpack.c.h.b16 %v159
    %v444 = vunpack.c.l.b16 %v160
    %v445 = vunpack.c.h.b16 %v160
    %v446 = vunpack.c.l.b16 %v161
    %v447 = vunpack.c.h.b16 %v161
    %v448 = vunpack.c.l.b16 %v162
    %v449 = vunpack.c.h.b16 %v162
    %v450 = vunpack.c.l.b16 %v163
    %v451 = vunpack.c.h.b16 %v163
    %v452 = vunpack.c.l.b16 %v164
    %v453 = vunpack.c.h.b16 %v164
    %v454 = vunpack.c.l.b16 %v165
    %v455 = vunpack.c.h.b16 %v165
    %v456 = vunpack.c.l.b16 %v166
    %v457 = vunpack.c.h.b16 %v166
    %v458 = vunpack.c.l.b16 %v167
    %v459 = vunpack.c.h.b16 %v167
    %v460 = vunpack.c.l.b16 %v168
    %v461 = vunpack.c.h.b16 %v168
    %v462 = vunpack.c.l.b16 %v169
    %v463 = vunpack.c.h.b16 %v169
    %v464 = vunpack.c.l.b16 %v170
    %v465 = vunpack.c.h.b16 %v170
    %v466 = vunpack.c.l.b16 %v171
    %v467 = vunpack.c.h.b16 %v171
    %v468 = vunpack.c.l.b16 %v172
    %v469 = vunpack.c.h.b16 %v172
    %v470 = vunpack.c.l.b16 %v173
    %v471 = vunpack.c.h.b16 %v173
    %v472 = vunpack.c.l.b16 %v174
    %v473 = vunpack.c.h.b16 %v174
    %v474 = vunpack.c.l.b16 %v175
    %v475 = vunpack.c.h.b16 %v175
    %v476 = vpack.c.b16 %v286, %v284
    %v477 = vpack.c.b16 %v287, %v285
    %v478 = vpack.c.b16 %v290, %v288
    %v479 = vpack.c.b16 %v291, %v289
    %v480 = vpack.c.b16 %v294, %v292
    %v481 = vpack.c.b16 %v295, %v293
    %v482 = vpack.c.b16 %v298, %v296
    %v483 = vpack.c.b16 %v299, %v297
    %v484 = vpack.c.b16 %v302, %v300
    %v485 = vpack.c.b16 %v303, %v301
    %v486 = vpack.c.b16 %v306, %v304
    %v487 = vpack.c.b16 %v307, %v305
    %v488 = vpack.c.b16 %v310, %v308
    %v489 = vpack.c.b16 %v311, %v309
    %v490 = vpack.c.b16 %v314, %v312
    %v491 = vpack.c.b16 %v315, %v313
    %v492 = vpack.c.b16 %v318, %v316
    %v493 = vpack.c.b16 %v319, %v317
    %v494 = vpack.c.b16 %v322, %v320
    %v495 = vpack.c.b16 %v323, %v321
    %v496 = vpack.c.b16 %v326, %v324
    %v497 = vpack.c.b16 %v327, %v325
    %v498 = vpack.c.b16 %v330, %v328
    %v499 = vpack.c.b16 %v331, %v329
    %v500 = vpack.c.b16 %v334, %v332
    %v501 = vpack.c.b16 %v335, %v333
    %v502 = vpack.c.b16 %v338, %v336
    %v503 = vpack.c.b16 %v339, %v337
    %v504 = vpack.c.b16 %v342, %v340
    %v505 = vpack.c.b16 %v343, %v341
    %v506 = vpack.c.b16 %v346, %v344
    %v507 = vpack.c.b16 %v347, %v345
    %v508 = vpack.c.b16 %v350, %v348
    %v509 = vpack.c.b16 %v351, %v349
    %v510 = vpack.c.b16 %v354, %v352
    %v511 = vpack.c.b16 %v355, %v353
    %v512 = vpack.c.b16 %v358, %v356
    %v513 = vpack.c.b16 %v359, %v357
    %v514 = vpack.c.b16 %v362, %v360
    %v515 = vpack.c.b16 %v363, %v361
    %v516 = vpack.c.b16 %v366, %v364
    %v517 = vpack.c.b16 %v367, %v365
    %v518 = vpack.c.b16 %v370, %v368
    %v519 = vpack.c.b16 %v371, %v369
    %v520 = vpack.c.b16 %v374, %v372
    %v521 = vpack.c.b16 %v375, %v373
    %v522 = vpack.c.b16 %v378, %v376
    %v523 = vpack.c.b16 %v379, %v377
    %v524 = vpack.c.b16 %v382, %v380
    %v525 = vpack.c.b16 %v383, %v381
    %v526 = vpack.c.b16 %v386, %v384
    %v527 = vpack.c.b16 %v387, %v385
    %v528 = vpack.c.b16 %v390, %v388
    %v529 = vpack.c.b16 %v391, %v389
    %v530 = vpack.c.b16 %v394, %v392
    %v531 = vpack.c.b16 %v395, %v393
    %v532 = vpack.c.b16 %v398, %v396
    %v533 = vpack.c.b16 %v399, %v397
    %v534 = vpack.c.b16 %v402, %v400
    %v535 = vpack.c.b16 %v403, %v401
    %v536 = vpack.c.b16 %v406, %v404
    %v537 = vpack.c.b16 %v407, %v405
    %v538 = vpack.c.b16 %v410, %v408
    %v539 = vpack.c.b16 %v411, %v409
    %v540 = vpack.c.b16 %v414, %v412
    %v541 = vpack.c.b16 %v415, %v413
    %v542 = vpack.c.b16 %v418, %v416
    %v543 = vpack.c.b16 %v419, %v417
    %v544 = vpack.c.b16 %v422, %v420
    %v545 = vpack.c.b16 %v423, %v421
    %v546 = vpack.c.b16 %v426, %v424
    %v547 = vpack.c.b16 %v427, %v425
    %v548 = vpack.c.b16 %v430, %v428
    %v549 = vpack.c.b16 %v431, %v429
    %v550 = vpack.c.b16 %v434, %v432
    %v551 = vpack.c.b16 %v435, %v433
    %v552 = vpack.c.b16 %v438, %v436
    %v553 = vpack.c.b16 %v439, %v437
    %v554 = vpack.c.b16 %v442, %v440
    %v555 = vpack.c.b16 %v443, %v441
    %v556 = vpack.c.b16 %v446, %v444
    %v557 = vpack.c.b16 %v447, %v445
    %v558 = vpack.c.b16 %v450, %v448
    %v559 = vpack.c.b16 %v451, %v449
    %v560 = vpack.c.b16 %v454, %v452
    %v561 = vpack.c.b16 %v455, %v453
    %v562 = vpack.c.b16 %v458, %v456
    %v563 = vpack.c.b16 %v459, %v457
    %v564 = vpack.c.b16 %v462, %v460
    %v565 = vpack.c.b16 %v463, %v461
    %v566 = vpack.c.b16 %v466, %v464
    %v567 = vpack.c.b16 %v467, %v465
    %v568 = vpack.c.b16 %v470, %v468
    %v569 = vpack.c.b16 %v471, %v469
    %v570 = vpack.c.b16 %v474, %v472
    %v571 = vpack.c.b16 %v475, %v473
    %668 = vmatprep.subr.bf16.mxu0 %v491
    %669 = vmatpush1.bf16.msra.mxu0 %v490
    %670 = vmatprep.subr.bf16.mxu0 %v489
    %671 = vmatpush1.bf16.msra.mxu0 %v488
    %672 = vmatprep.subr.bf16.mxu0 %v487
    %673 = vmatpush1.bf16.msra.mxu0 %v486
    %674 = vmatprep.subr.bf16.mxu0 %v485
    %675 = vmatpush1.bf16.msra.mxu0 %v484
    %676 = vmatprep.subr.bf16.mxu0 %v483
    %677 = vmatpush1.bf16.msra.mxu0 %v482
    %678 = vmatprep.subr.bf16.mxu0 %v481
    %679 = vmatpush1.bf16.msra.mxu0 %v480
    %680 = vmatprep.subr.bf16.mxu0 %v479
    %681 = vmatpush1.bf16.msra.mxu0 %v478
    %682 = vmatprep.subr.bf16.mxu0 %v477
    %683 = vmatpush1.bf16.msra.mxu0 %v476
    %684 = vmatprep.subr.bf16.mxu0 %v507
    %685 = vmatpush2.bf16.msra.mxu0 %v506
    %686 = vmatprep.subr.bf16.mxu0 %v505
    %687 = vmatpush2.bf16.msra.mxu0 %v504
    %688 = vmatprep.subr.bf16.mxu0 %v503
    %689 = vmatpush2.bf16.msra.mxu0 %v502
    %690 = vmatprep.subr.bf16.mxu0 %v501
    %691 = vmatpush2.bf16.msra.mxu0 %v500
    %692 = vmatprep.subr.bf16.mxu0 %v499
    %693 = vmatpush2.bf16.msra.mxu0 %v498
    %694 = vmatprep.subr.bf16.mxu0 %v497
    %695 = vmatpush2.bf16.msra.mxu0 %v496
    %696 = vmatprep.subr.bf16.mxu0 %v495
    %697 = vmatpush2.bf16.msra.mxu0 %v494
    %698 = vmatprep.subr.bf16.mxu0 %v493
    %699 = vmatpush2.bf16.msra.mxu0 %v492
    %700 = vmatprep.mubr.bf16.mxu0 %v75
    %701 = vmatmul.mubr.bf16.gmra.mxu0 %v74
    %v702 = vpop.f32.mrf.mxu0
    %v703 = vadd.f32 %v181, %v702
    %v704 = vpop.f32.mrf.mxu0
    %v705 = vadd.f32 %v185, %v704
    %v706 = vpop.f32.mrf.mxu0
    %v707 = vadd.f32 %v181, %v706
    %v708 = vpop.f32.mrf.mxu0
    %v709 = vadd.f32 %v185, %v708
    %710 = vdwg.mxu0
    %711 = vmatprep.subr.bf16.mxu0 %v523
    %712 = vmatpush1.bf16.msra.mxu0 %v522
    %713 = vmatprep.subr.bf16.mxu0 %v521
    %714 = vmatpush1.bf16.msra.mxu0 %v520
    %715 = vmatprep.subr.bf16.mxu0 %v519
    %716 = vmatpush1.bf16.msra.mxu0 %v518
    %717 = vmatprep.subr.bf16.mxu0 %v517
    %718 = vmatpush1.bf16.msra.mxu0 %v516
    %719 = vmatprep.subr.bf16.mxu0 %v515
    %720 = vmatpush1.bf16.msra.mxu0 %v514
    %721 = vmatprep.subr.bf16.mxu0 %v513
    %722 = vmatpush1.bf16.msra.mxu0 %v512
    %723 = vmatprep.subr.bf16.mxu0 %v511
    %724 = vmatpush1.bf16.msra.mxu0 %v510
    %725 = vmatprep.subr.bf16.mxu0 %v509
    %726 = vmatpush1.bf16.msra.mxu0 %v508
    %727 = vmatprep.subr.bf16.mxu0 %v539
    %728 = vmatpush2.bf16.msra.mxu0 %v538
    %729 = vmatprep.subr.bf16.mxu0 %v537
    %730 = vmatpush2.bf16.msra.mxu0 %v536
    %731 = vmatprep.subr.bf16.mxu0 %v535
    %732 = vmatpush2.bf16.msra.mxu0 %v534
    %733 = vmatprep.subr.bf16.mxu0 %v533
    %734 = vmatpush2.bf16.msra.mxu0 %v532
    %735 = vmatprep.subr.bf16.mxu0 %v531
    %736 = vmatpush2.bf16.msra.mxu0 %v530
    %737 = vmatprep.subr.bf16.mxu0 %v529
    %738 = vmatpush2.bf16.msra.mxu0 %v528
    %739 = vmatprep.subr.bf16.mxu0 %v527
    %740 = vmatpush2.bf16.msra.mxu0 %v526
    %741 = vmatprep.subr.bf16.mxu0 %v525
    %742 = vmatpush2.bf16.msra.mxu0 %v524
    %743 = vmatprep.mubr.bf16.mxu0 %v77
    %744 = vmatmul.mubr.bf16.gmra.mxu0 %v76
    %v745 = vpop.f32.mrf.mxu0
    %v746 = vadd.f32 %v703, %v745
    %v747 = vpop.f32.mrf.mxu0
    %v748 = vadd.f32 %v705, %v747
    %v749 = vpop.f32.mrf.mxu0
    %v750 = vadd.f32 %v707, %v749
    %v751 = vpop.f32.mrf.mxu0
    %v752 = vadd.f32 %v709, %v751
    %753 = vdwg.mxu0
    %754 = vmatprep.subr.bf16.mxu0 %v555
    %755 = vmatpush1.bf16.msra.mxu0 %v554
    %756 = vmatprep.subr.bf16.mxu0 %v553
    %757 = vmatpush1.bf16.msra.mxu0 %v552
    %758 = vmatprep.subr.bf16.mxu0 %v551
    %759 = vmatpush1.bf16.msra.mxu0 %v550
    %760 = vmatprep.subr.bf16.mxu0 %v549
    %761 = vmatpush1.bf16.msra.mxu0 %v548
    %762 = vmatprep.subr.bf16.mxu0 %v547
    %763 = vmatpush1.bf16.msra.mxu0 %v546
    %764 = vmatprep.subr.bf16.mxu0 %v545
    %765 = vmatpush1.bf16.msra.mxu0 %v544
    %766 = vmatprep.subr.bf16.mxu0 %v543
    %767 = vmatpush1.bf16.msra.mxu0 %v542
    %768 = vmatprep.subr.bf16.mxu0 %v541
    %769 = vmatpush1.bf16.msra.mxu0 %v540
    %770 = vmatprep.subr.bf16.mxu0 %v571
    %771 = vmatpush2.bf16.msra.mxu0 %v570
    %772 = vmatprep.subr.bf16.mxu0 %v569
    %773 = vmatpush2.bf16.msra.mxu0 %v568
    %774 = vmatprep.subr.bf16.mxu0 %v567
    %775 = vmatpush2.bf16.msra.mxu0 %v566
    %776 = vmatprep.subr.bf16.mxu0 %v565
    %777 = vmatpush2.bf16.msra.mxu0 %v564
    %778 = vmatprep.subr.bf16.mxu0 %v563
    %779 = vmatpush2.bf16.msra.mxu0 %v562
    %780 = vmatprep.subr.bf16.mxu0 %v561
    %781 = vmatpush2.bf16.msra.mxu0 %v560
    %782 = vmatprep.subr.bf16.mxu0 %v559
    %783 = vmatpush2.bf16.msra.mxu0 %v558
    %784 = vmatprep.subr.bf16.mxu0 %v557
    %785 = vmatpush2.bf16.msra.mxu0 %v556
    %786 = vmatprep.mubr.bf16.mxu0 %v79
    %787 = vmatmul.mubr.bf16.gmra.mxu0 %v78
    %v788 = vpop.f32.mrf.mxu0
    %v789 = vadd.f32 %v746, %v788
    %v790 = vpop.f32.mrf.mxu0
    %v791 = vadd.f32 %v748, %v790
    %v792 = vpop.f32.mrf.mxu0
    %v793 = vadd.f32 %v750, %v792
    %v794 = vpop.f32.mrf.mxu0
    %v795 = vadd.f32 %v752, %v794
    %796 = vdwg.mxu0
    %v797 = vmul.f32 %v789, 0.01
    %v798 = vmul.f32 %v791, 0.01
    %v799 = vmul.f32 %v793, 0.01
    %v800 = vmul.f32 %v795, 0.01
    %v801 = vmax.f32 %v789, %v797
    %v802 = vmax.f32 %v791, %v798
    %v803 = vmax.f32 %v793, %v799
    %v804 = vmax.f32 %v795, %v800
    %v805 = vld [vmem:[#allocation7] sm:$0xff]
    %v806 = vld [vmem:[#allocation7 + $0x8] sm:$0xff]
    %v807 = vld [vmem:[#allocation7 + $0x10] sm:$0xff]
    %v808 = vld [vmem:[#allocation7 + $0x18] sm:$0xff]
    %v809 = vld [vmem:[#allocation7 + $0x20] sm:$0xff]
    %v810 = vld [vmem:[#allocation7 + $0x28] sm:$0xff]
    %v811 = vld [vmem:[#allocation7 + $0x30] sm:$0xff]
    %v812 = vld [vmem:[#allocation7 + $0x38] sm:$0xff]
    %v813 = vld [vmem:[#allocation7 + $0x40] sm:$0xff]
    %v814 = vld [vmem:[#allocation7 + $0x48] sm:$0xff]
    %v815 = vld [vmem:[#allocation7 + $0x50] sm:$0xff]
    %v816 = vld [vmem:[#allocation7 + $0x58] sm:$0xff]
    %v817 = vld [vmem:[#allocation7 + $0x60] sm:$0xff]
    %v818 = vld [vmem:[#allocation7 + $0x68] sm:$0xff]
    %v819 = vld [vmem:[#allocation7 + $0x70] sm:$0xff]
    %v820 = vld [vmem:[#allocation7 + $0x78] sm:$0xff]
    %v821 = vld [vmem:[#allocation7 + $0x80] sm:$0xff]
    %v822 = vld [vmem:[#allocation7 + $0x88] sm:$0xff]
    %v823 = vld [vmem:[#allocation7 + $0x90] sm:$0xff]
    %v824 = vld [vmem:[#allocation7 + $0x98] sm:$0xff]
    %v825 = vld [vmem:[#allocation7 + $0xa0] sm:$0xff]
    %v826 = vld [vmem:[#allocation7 + $0xa8] sm:$0xff]
    %v827 = vld [vmem:[#allocation7 + $0xb0] sm:$0xff]
    %v828 = vld [vmem:[#allocation7 + $0xb8] sm:$0xff]
    %v829 = vld [vmem:[#allocation7 + $0xc0] sm:$0xff]
    %v830 = vld [vmem:[#allocation7 + $0xc8] sm:$0xff]
    %v831 = vld [vmem:[#allocation7 + $0xd0] sm:$0xff]
    %v832 = vld [vmem:[#allocation7 + $0xd8] sm:$0xff]
    %v833 = vld [vmem:[#allocation7 + $0xe0] sm:$0xff]
    %v834 = vld [vmem:[#allocation7 + $0xe8] sm:$0xff]
    %v835 = vld [vmem:[#allocation7 + $0xf0] sm:$0xff]
    %v836 = vld [vmem:[#allocation7 + $0xf8] sm:$0xff]
    %v837 = vld [vmem:[%s4] sm:$0x1]
    %v839 = vlaneseq
    %v840 = vshrl.u32 %v839, 7
    %v841 = vsub.s32 0, %v840
    %v842 = vrot.slane %v837, %v841
    %844 = vmatprep.subr.mxu0 0.0
    %845 = vmatpush1.msra.mxu0 %v820
    %846 = vmatprep.subr.mxu0 0.0
    %847 = vmatpush1.msra.mxu0 %v819
    %848 = vmatprep.subr.mxu0 0.0
    %849 = vmatpush1.msra.mxu0 %v818
    %850 = vmatprep.subr.mxu0 0.0
    %851 = vmatpush1.msra.mxu0 %v817
    %852 = vmatprep.subr.mxu0 0.0
    %853 = vmatpush1.msra.mxu0 %v816
    %854 = vmatprep.subr.mxu0 0.0
    %855 = vmatpush1.msra.mxu0 %v815
    %856 = vmatprep.subr.mxu0 0.0
    %857 = vmatpush1.msra.mxu0 %v814
    %858 = vmatprep.subr.mxu0 0.0
    %859 = vmatpush1.msra.mxu0 %v813
    %860 = vmatprep.subr.mxu0 0.0
    %861 = vmatpush1.msra.mxu0 %v812
    %862 = vmatprep.subr.mxu0 0.0
    %863 = vmatpush1.msra.mxu0 %v811
    %864 = vmatprep.subr.mxu0 0.0
    %865 = vmatpush1.msra.mxu0 %v810
    %866 = vmatprep.subr.mxu0 0.0
    %867 = vmatpush1.msra.mxu0 %v809
    %868 = vmatprep.subr.mxu0 0.0
    %869 = vmatpush1.msra.mxu0 %v808
    %870 = vmatprep.subr.mxu0 0.0
    %871 = vmatpush1.msra.mxu0 %v807
    %872 = vmatprep.subr.mxu0 0.0
    %873 = vmatpush1.msra.mxu0 %v806
    %874 = vmatprep.subr.mxu0 0.0
    %875 = vmatpush1.msra.mxu0 %v805
    %876 = vmatprep.subr.mxu0 0.0
    %877 = vmatpush2.msra.mxu0 %v836
    %878 = vmatprep.subr.mxu0 0.0
    %879 = vmatpush2.msra.mxu0 %v835
    %880 = vmatprep.subr.mxu0 0.0
    %881 = vmatpush2.msra.mxu0 %v834
    %882 = vmatprep.subr.mxu0 0.0
    %883 = vmatpush2.msra.mxu0 %v833
    %884 = vmatprep.subr.mxu0 0.0
    %885 = vmatpush2.msra.mxu0 %v832
    %886 = vmatprep.subr.mxu0 0.0
    %887 = vmatpush2.msra.mxu0 %v831
    %888 = vmatprep.subr.mxu0 0.0
    %889 = vmatpush2.msra.mxu0 %v830
    %890 = vmatprep.subr.mxu0 0.0
    %891 = vmatpush2.msra.mxu0 %v829
    %892 = vmatprep.subr.mxu0 0.0
    %893 = vmatpush2.msra.mxu0 %v828
    %894 = vmatprep.subr.mxu0 0.0
    %895 = vmatpush2.msra.mxu0 %v827
    %896 = vmatprep.subr.mxu0 0.0
    %897 = vmatpush2.msra.mxu0 %v826
    %898 = vmatprep.subr.mxu0 0.0
    %899 = vmatpush2.msra.mxu0 %v825
    %900 = vmatprep.subr.mxu0 0.0
    %901 = vmatpush2.msra.mxu0 %v824
    %902 = vmatprep.subr.mxu0 0.0
    %903 = vmatpush2.msra.mxu0 %v823
    %904 = vmatprep.subr.mxu0 0.0
    %905 = vmatpush2.msra.mxu0 %v822
    %906 = vmatprep.subr.mxu0 0.0
    %907 = vmatpush2.msra.mxu0 %v821
    %908 = vmatprep.mubr.f32.mxu0 %v802
    %909 = vmatmul.mubr.f32.gmra.mxu0 %v801
    %v910 = vpop.f32.mrf.mxu0
    %v911 = vadd.f32 %v842, %v910
    %v912 = vpop.f32.mrf.mxu0
    %913 = vmatprep.mubr.f32.mxu0 %v804
    %914 = vmatmul.mubr.f32.gmra.mxu0 %v803
    %v915 = vpop.f32.mrf.mxu0
    %v916 = vadd.f32 %v842, %v915
    %v917 = vpop.f32.mrf.mxu0
    %918 = vdwg.mxu0
    %v919 = vpack.c.bf16 %v916, %v911
    %v921 = vunpack.c.l.b16 %v919
    %v922 = vunpack.c.h.b16 %v919
    %v923 = vpack.c.b16 %v921, %v921
    %v924 = vpack.c.b16 %v922, %v922
    %927 = vst [vmem:[#allocation8] sm:$0xf] %v923
    %928 = vst [vmem:[#allocation8 + $0x4] sm:$0xf] %v924
    // Predicated region
    $region34: #{tpu_custom_call.1} parent=1 // pred_check
      _
    $region35: #{tpu_custom_call.1} parent=1 // pred_check_branch
      %930 = sbr.rel (0) target = $region37
    $region36: #{tpu_custom_call.1} parent=1 // pred_region
      %s932 = ssub.s32 128, 128
      %933 = vsyncadd [#allocation4], %s932
      %s934 = sshll.u32 [#allocation8], 4
      %s935 = int_to_ptr.vmem [resolvable:$true] %s934
      %940 = dma.vmem_to_hbm [thread:$0]  %s935, 128, %s5, [#allocation4], 64, 64, 4
    $region37: #{tpu_custom_call.1} parent=1 // pred_fallthru
      _
    // Predicated region
    $region38: #{tpu_custom_call.1} parent=1 // pred_check
      _
    $region39: #{tpu_custom_call.1} parent=1 // pred_check_branch
      %942 = sbr.rel (0) target = $region41
    $region40: #{tpu_custom_call.1} parent=1 // pred_region
      %943 = dma.done [#allocation4], 128
    $region41: #{tpu_custom_call.1} parent=1 // pred_fallthru
      _
    %944 = vsyncpa [#allocation3], 1
    %945 = vsyncpa [#allocation6], 1
    %946 = vsyncpa [#allocation4], 1

</llo_original>
